<compile_context>
chip_gen: v5e
topology: v5e:2x2
jax: 0.10.0
libtpu: 0.0.40
codegen_flags: <defaults>
</compile_context>

<pallas_src>
import functools

import jax
import jax.numpy as jnp
from jax import lax
from jax.experimental import pallas as pl
from jax.experimental.pallas import tpu as pltpu

_K = 3  # conv kernel size


# ---------------------------------------------------------------------------
# Pallas kernel: one output depth-slice = sum of 8 shifted (C_out,8C)@(8C,M)
# ---------------------------------------------------------------------------
def _fused_conv_kernel(x0_ref, x1_ref, w_ref, b_ref, o_ref, *, wp):
    """x0/x1: (C8, S) bf16 haloed slabs (s2d depth-blocks d and d+1).
    w: (8, C_out_p, C8) bf16 per-offset weights. b: (C_out_p, 1) f32.
    o: (C_out_p, S_out) f32 with S_out = Ho*Wp (flat, lane-dense)."""
    c_out_p, s_out = o_ref.shape
    x_slabs = (x0_ref[...], x1_ref[...])          # load each slab once

    acc = jnp.zeros((c_out_p, s_out), jnp.float32)
    for r in range(8):                            # static 8-tap loop
        rd = (r >> 2) & 1
        rh = (r >> 1) & 1
        rw = r & 1
        off = rh * wp + rw                        # static flat shift within slab
        xm = x_slabs[rd][:, off:off + s_out]      # (C8, S_out) shifted window
        acc = acc + jnp.dot(w_ref[r], xm, preferred_element_type=jnp.float32)

    o_ref[...] = (acc + b_ref[...]).astype(o_ref.dtype)


# ---------------------------------------------------------------------------
# Forward: NewConvDown.forward == Conv3d(k=3, stride=2, padding=1)
# ---------------------------------------------------------------------------
def new_conv_down_forward(x, weight, bias, *, stride=2):
    if stride != 2:
        # TODO(synk): general-stride path (the s2d decomposition below is stride-2 only).
        raise NotImplementedError("fused kernel implemented for stride=2 only")

    N, C, D, H, W = x.shape
    C_out = weight.shape[0]
    Do = (D - 1) // 2 + 1
    Ho = (H - 1) // 2 + 1
    Wo = (W - 1) // 2 + 1
    C8 = 8 * C
    C_out_p = -(-C_out // 8) * 8
    Dp, Hp, Wp = Do + 1, Ho + 2, Wo + 2           # front halo on D; front+back on H, W
    S, S_out = Hp * Wp, Ho * Wp

    cd = jnp.bfloat16

    # ---- activations: space-to-depth (1x traffic), channel-major slabs ----
    xe = x.astype(cd)
    xe = jnp.pad(xe, ((0, 0), (0, 0), (0, 2 * Do - D), (0, 2 * Ho - H), (0, 2 * Wo - W)))
    xe = xe.reshape(N, C, Do, 2, Ho, 2, Wo, 2)
    xe = jnp.transpose(xe, (0, 2, 1, 3, 5, 7, 4, 6))      # (N, Do, C, pd, ph, pw, Ho, Wo)
    xs = xe.reshape(N, Do, C8, Ho, Wo)
    xs = jnp.pad(xs, ((0, 0), (1, 0), (0, 0), (1, 1), (1, 1)))   # zero halos
    xs = xs.reshape(N, Dp, C8, S)

    # ---- weights: scatter the 27 taps into 8 block-offset matrices ----
    # kernel tap k -> (block offset r, s2d phase p):  0->(0,1), 1->(1,0), 2->(1,1)
    kmap = ((0, 1), (1, 0), (1, 1))
    wfull = jnp.zeros((2, 2, 2, 2, 2, 2, C_out, C), jnp.float32)  # [rd,pd,rh,ph,rw,pw,co,ci]
    for kd in range(_K):
        rd, pd = kmap[kd]
        for kh in range(_K):
            rh, ph = kmap[kh]
            for kw in range(_K):
                rw, pw = kmap[kw]
                wfull = wfull.at[rd, pd, rh, ph, rw, pw].set(weight[:, :, kd, kh, kw])
    wstk = jnp.transpose(wfull, (0, 2, 4, 6, 7, 1, 3, 5)).reshape(8, C_out, C8)
    wstk = jnp.pad(wstk, ((0, 0), (0, C_out_p - C_out), (0, 0))).astype(cd)
    bias2 = jnp.pad(bias.astype(jnp.float32), (0, C_out_p - C_out)).reshape(C_out_p, 1)

    # ---- VMEM budget: double-buffered per-step footprint + headroom ----
    step_bytes = (2 * C8 * S * 2            # two bf16 input slabs
                  + 8 * C_out_p * C8 * 2    # weights
                  + C_out_p * 4             # bias
                  + C_out_p * S_out * 4)    # f32 output tile
    buffered = 2 * step_bytes
    assert buffered < (40 << 20), (
        "per-step slabs exceed VMEM budget; add C8/spatial tiling")  # TODO(synk)
    vmem_limit = int(min(max(buffered + (4 << 20), 16 << 20), 48 << 20))

    cost = pl.CostEstimate(
        flops=2 * N * Do * 8 * C_out_p * C8 * S_out,
        transcendentals=0,
        bytes_accessed=2 * xs.size * 2 + wstk.size * 2 + N * Do * C_out_p * S_out * 4,
    )

    kernel = functools.partial(_fused_conv_kernel, wp=Wp)
    out_fat = pl.pallas_call(
        kernel,
        out_shape=jax.ShapeDtypeStruct((N, Do, C_out_p, S_out), jnp.float32),
        grid_spec=pltpu.PrefetchScalarGridSpec(
            num_scalar_prefetch=0,
            grid=(N, Do),
            in_specs=[
                pl.BlockSpec((None, None, C8, S), lambda n, d: (n, d, 0, 0)),
                pl.BlockSpec((None, None, C8, S), lambda n, d: (n, d + 1, 0, 0)),
                pl.BlockSpec((8, C_out_p, C8), lambda n, d: (0, 0, 0)),
                pl.BlockSpec((C_out_p, 1), lambda n, d: (0, 0)),
            ],
            out_specs=pl.BlockSpec((None, None, C_out_p, S_out),
                                   lambda n, d: (n, d, 0, 0)),
        ),
        compiler_params=pltpu.CompilerParams(
            dimension_semantics=("parallel", "parallel"),
            vmem_limit_bytes=vmem_limit,
        ),
        cost_estimate=cost,
    )(xs, xs, wstk, bias2)

    out = out_fat.reshape(N, Do, C_out_p, Ho, Wp)[:, :, :C_out, :, :Wo]
    return jnp.transpose(out, (0, 2, 1, 3, 4))            # -> NCDHW


# ---------------------------------------------------------------------------
# Deterministic parameter init (PyTorch Conv3d-style uniform bounds)
# ---------------------------------------------------------------------------
def init_params(key, c_in, c_out, ksize=3):
    kw_key, kb_key = jax.random.split(key)
    fan_in = c_in * ksize**3
    bound = 1.0 / jnp.sqrt(fan_in)
    weight = jax.random.uniform(
        kw_key, (c_out, c_in, ksize, ksize, ksize),
        minval=-bound, maxval=bound, dtype=jnp.float32,
    )
    bias = jax.random.uniform(
        kb_key, (c_out,), minval=-bound, maxval=bound, dtype=jnp.float32
    )
    return weight, bias


if __name__ == "__main__":
    key = jax.random.PRNGKey(0)
    k_x, k_p = jax.random.split(key)

    N, C_in, D, H, W = 2, 4, 16, 16, 16
    C_out = 8

    x = jax.random.normal(k_x, (N, C_in, D, H, W), dtype=jnp.float32)
    weight, bias = init_params(k_p, C_in, C_out)

    fwd = jax.jit(functools.partial(new_conv_down_forward, stride=2))
    out = jax.block_until_ready(fwd(x, weight, bias))

    # Reference: XLA conv on identically bf16-rounded operands, f32 accumulate
    # (same semantics as torch Conv3d with bf16-storage weights/activations).
    xq = x.astype(jnp.bfloat16).astype(jnp.float32)
    wq = weight.astype(jnp.bfloat16).astype(jnp.float32)
    ref = lax.conv_general_dilated(
        xq, wq,
        window_strides=(2, 2, 2),
        padding=((1, 1), (1, 1), (1, 1)),
        dimension_numbers=("NCDHW", "OIDHW", "NCDHW"),
        preferred_element_type=jnp.float32,
    ) + bias.reshape(1, C_out, 1, 1, 1)

    assert out.shape == ref.shape, (out.shape, ref.shape)
    assert jnp.allclose(out, ref, atol=2e-3, rtol=2e-3), float(
        jnp.max(jnp.abs(out - ref))
    )

    print("KERNEL_OK")
</pallas_src>

<mosaic_0001>
module attributes {stable_mosaic.version = 11 : i64} {
  func.func @_fused_conv_kernel(%arg0: i32, %arg1: i32, %arg2: memref<1x1x32x100xbf16, #tpu.memory_space<vmem>>, %arg3: memref<1x1x32x100xbf16, #tpu.memory_space<vmem>>, %arg4: memref<8x8x32xbf16, #tpu.memory_space<vmem>>, %arg5: memref<8x1xf32, #tpu.memory_space<vmem>>, %arg6: memref<1x1x8x80xf32, #tpu.memory_space<vmem>>) attributes {dimension_semantics = [#tpu.dimension_semantics<parallel>, #tpu.dimension_semantics<parallel>], iteration_bounds = array<i64: 2, 8>, scalar_prefetch = 0 : i64, scratch_operands = 0 : i64, tpu.core_type = #tpu.core_type<tc>, window_params = [{transform_indices = @transform_0, window_bounds = array<i64: 1, 1, 32, 100>}, {transform_indices = @transform_1, window_bounds = array<i64: 1, 1, 32, 100>}, {pipeline_mode = #tpu.pipeline_mode<synchronous>, transform_indices = @transform_2, window_bounds = array<i64: 8, 8, 32>}, {pipeline_mode = #tpu.pipeline_mode<synchronous>, transform_indices = @transform_3, window_bounds = array<i64: 8, 1>}, {transform_indices = @transform_4, window_bounds = array<i64: 1, 1, 8, 80>}]} {
    %c0 = arith.constant 0 : index
    %c0_0 = arith.constant 0 : index
    %c0_1 = arith.constant 0 : index
    %c0_2 = arith.constant 0 : index
    %0 = vector.load %arg2[%c0, %c0_0, %c0_1, %c0_2] : memref<1x1x32x100xbf16, #tpu.memory_space<vmem>>, vector<1x1x32x100xbf16>
    %1 = vector.shape_cast %0 : vector<1x1x32x100xbf16> to vector<32x100xbf16>
    %c0_3 = arith.constant 0 : index
    %c0_4 = arith.constant 0 : index
    %c0_5 = arith.constant 0 : index
    %c0_6 = arith.constant 0 : index
    %2 = vector.load %arg3[%c0_3, %c0_4, %c0_5, %c0_6] : memref<1x1x32x100xbf16, #tpu.memory_space<vmem>>, vector<1x1x32x100xbf16>
    %3 = vector.shape_cast %2 : vector<1x1x32x100xbf16> to vector<32x100xbf16>
    %cst = arith.constant 0.000000e+00 : f32
    %4 = vector.broadcast %cst : f32 to vector<8x80xf32>
    %5 = vector.extract_strided_slice %1 {offsets = [0, 0], sizes = [32, 80], strides = [1, 1]} : vector<32x100xbf16> to vector<32x80xbf16>
    %c0_7 = arith.constant 0 : index
    %c0_8 = arith.constant 0 : index
    %c0_9 = arith.constant 0 : index
    %6 = vector.load %arg4[%c0_7, %c0_8, %c0_9] : memref<8x8x32xbf16, #tpu.memory_space<vmem>>, vector<1x8x32xbf16>
    %7 = vector.shape_cast %6 : vector<1x8x32xbf16> to vector<8x32xbf16>
    %cst_10 = arith.constant dense<0.000000e+00> : vector<8x80xf32>
    %8 = tpu.matmul %7, %5, %cst_10 {dimension_numbers = #tpu.dot_dimension_numbers<[1], [0], [0], [1], [0, 0, 1, 1], [], []>} : vector<8x32xbf16>, vector<32x80xbf16>, vector<8x80xf32> -> vector<8x80xf32>
    %9 = arith.addf %4, %8 : vector<8x80xf32>
    %10 = vector.extract_strided_slice %1 {offsets = [0, 1], sizes = [32, 80], strides = [1, 1]} : vector<32x100xbf16> to vector<32x80xbf16>
    %c1 = arith.constant 1 : index
    %c0_11 = arith.constant 0 : index
    %c0_12 = arith.constant 0 : index
    %11 = vector.load %arg4[%c1, %c0_11, %c0_12] : memref<8x8x32xbf16, #tpu.memory_space<vmem>>, vector<1x8x32xbf16>
    %12 = vector.shape_cast %11 : vector<1x8x32xbf16> to vector<8x32xbf16>
    %cst_13 = arith.constant dense<0.000000e+00> : vector<8x80xf32>
    %13 = tpu.matmul %12, %10, %cst_13 {dimension_numbers = #tpu.dot_dimension_numbers<[1], [0], [0], [1], [0, 0, 1, 1], [], []>} : vector<8x32xbf16>, vector<32x80xbf16>, vector<8x80xf32> -> vector<8x80xf32>
    %14 = arith.addf %9, %13 : vector<8x80xf32>
    %15 = vector.extract_strided_slice %1 {offsets = [0, 10], sizes = [32, 80], strides = [1, 1]} : vector<32x100xbf16> to vector<32x80xbf16>
    %c2 = arith.constant 2 : index
    %c0_14 = arith.constant 0 : index
    %c0_15 = arith.constant 0 : index
    %16 = vector.load %arg4[%c2, %c0_14, %c0_15] : memref<8x8x32xbf16, #tpu.memory_space<vmem>>, vector<1x8x32xbf16>
    %17 = vector.shape_cast %16 : vector<1x8x32xbf16> to vector<8x32xbf16>
    %cst_16 = arith.constant dense<0.000000e+00> : vector<8x80xf32>
    %18 = tpu.matmul %17, %15, %cst_16 {dimension_numbers = #tpu.dot_dimension_numbers<[1], [0], [0], [1], [0, 0, 1, 1], [], []>} : vector<8x32xbf16>, vector<32x80xbf16>, vector<8x80xf32> -> vector<8x80xf32>
    %19 = arith.addf %14, %18 : vector<8x80xf32>
    %20 = vector.extract_strided_slice %1 {offsets = [0, 11], sizes = [32, 80], strides = [1, 1]} : vector<32x100xbf16> to vector<32x80xbf16>
    %c3 = arith.constant 3 : index
    %c0_17 = arith.constant 0 : index
    %c0_18 = arith.constant 0 : index
    %21 = vector.load %arg4[%c3, %c0_17, %c0_18] : memref<8x8x32xbf16, #tpu.memory_space<vmem>>, vector<1x8x32xbf16>
    %22 = vector.shape_cast %21 : vector<1x8x32xbf16> to vector<8x32xbf16>
    %cst_19 = arith.constant dense<0.000000e+00> : vector<8x80xf32>
    %23 = tpu.matmul %22, %20, %cst_19 {dimension_numbers = #tpu.dot_dimension_numbers<[1], [0], [0], [1], [0, 0, 1, 1], [], []>} : vector<8x32xbf16>, vector<32x80xbf16>, vector<8x80xf32> -> vector<8x80xf32>
    %24 = arith.addf %19, %23 : vector<8x80xf32>
    %25 = vector.extract_strided_slice %3 {offsets = [0, 0], sizes = [32, 80], strides = [1, 1]} : vector<32x100xbf16> to vector<32x80xbf16>
    %c4 = arith.constant 4 : index
    %c0_20 = arith.constant 0 : index
    %c0_21 = arith.constant 0 : index
    %26 = vector.load %arg4[%c4, %c0_20, %c0_21] : memref<8x8x32xbf16, #tpu.memory_space<vmem>>, vector<1x8x32xbf16>
    %27 = vector.shape_cast %26 : vector<1x8x32xbf16> to vector<8x32xbf16>
    %cst_22 = arith.constant dense<0.000000e+00> : vector<8x80xf32>
    %28 = tpu.matmul %27, %25, %cst_22 {dimension_numbers = #tpu.dot_dimension_numbers<[1], [0], [0], [1], [0, 0, 1, 1], [], []>} : vector<8x32xbf16>, vector<32x80xbf16>, vector<8x80xf32> -> vector<8x80xf32>
    %29 = arith.addf %24, %28 : vector<8x80xf32>
    %30 = vector.extract_strided_slice %3 {offsets = [0, 1], sizes = [32, 80], strides = [1, 1]} : vector<32x100xbf16> to vector<32x80xbf16>
    %c5 = arith.constant 5 : index
    %c0_23 = arith.constant 0 : index
    %c0_24 = arith.constant 0 : index
    %31 = vector.load %arg4[%c5, %c0_23, %c0_24] : memref<8x8x32xbf16, #tpu.memory_space<vmem>>, vector<1x8x32xbf16>
    %32 = vector.shape_cast %31 : vector<1x8x32xbf16> to vector<8x32xbf16>
    %cst_25 = arith.constant dense<0.000000e+00> : vector<8x80xf32>
    %33 = tpu.matmul %32, %30, %cst_25 {dimension_numbers = #tpu.dot_dimension_numbers<[1], [0], [0], [1], [0, 0, 1, 1], [], []>} : vector<8x32xbf16>, vector<32x80xbf16>, vector<8x80xf32> -> vector<8x80xf32>
    %34 = arith.addf %29, %33 : vector<8x80xf32>
    %35 = vector.extract_strided_slice %3 {offsets = [0, 10], sizes = [32, 80], strides = [1, 1]} : vector<32x100xbf16> to vector<32x80xbf16>
    %c6 = arith.constant 6 : index
    %c0_26 = arith.constant 0 : index
    %c0_27 = arith.constant 0 : index
    %36 = vector.load %arg4[%c6, %c0_26, %c0_27] : memref<8x8x32xbf16, #tpu.memory_space<vmem>>, vector<1x8x32xbf16>
    %37 = vector.shape_cast %36 : vector<1x8x32xbf16> to vector<8x32xbf16>
    %cst_28 = arith.constant dense<0.000000e+00> : vector<8x80xf32>
    %38 = tpu.matmul %37, %35, %cst_28 {dimension_numbers = #tpu.dot_dimension_numbers<[1], [0], [0], [1], [0, 0, 1, 1], [], []>} : vector<8x32xbf16>, vector<32x80xbf16>, vector<8x80xf32> -> vector<8x80xf32>
    %39 = arith.addf %34, %38 : vector<8x80xf32>
    %40 = vector.extract_strided_slice %3 {offsets = [0, 11], sizes = [32, 80], strides = [1, 1]} : vector<32x100xbf16> to vector<32x80xbf16>
    %c7 = arith.constant 7 : index
    %c0_29 = arith.constant 0 : index
    %c0_30 = arith.constant 0 : index
    %41 = vector.load %arg4[%c7, %c0_29, %c0_30] : memref<8x8x32xbf16, #tpu.memory_space<vmem>>, vector<1x8x32xbf16>
    %42 = vector.shape_cast %41 : vector<1x8x32xbf16> to vector<8x32xbf16>
    %cst_31 = arith.constant dense<0.000000e+00> : vector<8x80xf32>
    %43 = tpu.matmul %42, %40, %cst_31 {dimension_numbers = #tpu.dot_dimension_numbers<[1], [0], [0], [1], [0, 0, 1, 1], [], []>} : vector<8x32xbf16>, vector<32x80xbf16>, vector<8x80xf32> -> vector<8x80xf32>
    %44 = arith.addf %39, %43 : vector<8x80xf32>
    %c0_32 = arith.constant 0 : index
    %c0_33 = arith.constant 0 : index
    %45 = vector.load %arg5[%c0_32, %c0_33] : memref<8x1xf32, #tpu.memory_space<vmem>>, vector<8x1xf32>
    %46 = vector.broadcast %45 : vector<8x1xf32> to vector<8x80xf32>
    %47 = arith.addf %44, %46 : vector<8x80xf32>
    %c0_34 = arith.constant 0 : index
    %c0_35 = arith.constant 0 : index
    %c0_36 = arith.constant 0 : index
    %c0_37 = arith.constant 0 : index
    %48 = vector.load %arg6[%c0_34, %c0_35, %c0_36, %c0_37] : memref<1x1x8x80xf32, #tpu.memory_space<vmem>>, vector<1x1x8x80xf32>
    %49 = vector.shape_cast %48 : vector<1x1x8x80xf32> to vector<8x80xf32>
    %50 = vector.shape_cast %47 : vector<8x80xf32> to vector<1x1x8x80xf32>
    tpu.vector_store %arg6[%c0_34, %c0_35, %c0_36, %c0_37], %50 {strides = array<i32>} : memref<1x1x8x80xf32, #tpu.memory_space<vmem>>, vector<1x1x8x80xf32>,
    return
  }
  func.func @transform_0(%arg0: i32, %arg1: i32) -> (i32, i32, i32, i32) {
    %c0_i32 = arith.constant 0 : i32
    %c0_i32_0 = arith.constant 0 : i32
    %c0_i32_1 = arith.constant 0 : i32
    return %arg0, %arg1, %c0_i32, %c0_i32_0 : i32, i32, i32, i32
  }
  func.func @transform_1(%arg0: i32, %arg1: i32) -> (i32, i32, i32, i32) {
    %c1_i32 = arith.constant 1 : i32
    %0 = arith.addi %arg1, %c1_i32 : i32
    %c0_i32 = arith.constant 0 : i32
    %c0_i32_0 = arith.constant 0 : i32
    %c0_i32_1 = arith.constant 0 : i32
    return %arg0, %0, %c0_i32, %c0_i32_0 : i32, i32, i32, i32
  }
  func.func @transform_2(%arg0: i32, %arg1: i32) -> (i32, i32, i32) {
    %c0_i32 = arith.constant 0 : i32
    %c0_i32_0 = arith.constant 0 : i32
    %c0_i32_1 = arith.constant 0 : i32
    %c0_i32_2 = arith.constant 0 : i32
    return %c0_i32, %c0_i32_0, %c0_i32_1 : i32, i32, i32
  }
  func.func @transform_3(%arg0: i32, %arg1: i32) -> (i32, i32) {
    %c0_i32 = arith.constant 0 : i32
    %c0_i32_0 = arith.constant 0 : i32
    %c0_i32_1 = arith.constant 0 : i32
    return %c0_i32, %c0_i32_0 : i32, i32
  }
  func.func @transform_4(%arg0: i32, %arg1: i32) -> (i32, i32, i32, i32) {
    %c0_i32 = arith.constant 0 : i32
    %c0_i32_0 = arith.constant 0 : i32
    %c0_i32_1 = arith.constant 0 : i32
    return %arg0, %arg1, %c0_i32, %c0_i32_0 : i32, i32, i32, i32
  }
}

</mosaic_0001>

<llo_original>
// kernel: new_conv_down_forward.1
$region0: #{new_conv_down_forward.1}
  #allocation0 [shape = 'u32[]', space=smem, size = 0x4, offset = 0x4, fixed_abs, tag = 'smem constant byte address 0x4 - core index']
  #allocation1 [shape = 'u32[72,128]{1,0:T(1,128)}', space=vmem, size = 0x9000, scoped, tag = 'internal scratch']
  %s0 = inlined_call_operand.vmem [shape: bf16[2,9,32,100], index: 0, kind: input, shape index: {}, may-alias: {0,1}]
  %s1 = inlined_call_operand.vmem [shape: bf16[2,9,32,100], index: 1, kind: input, shape index: {}, may-alias: {0,1}]
  %s2 = inlined_call_operand.vmem [shape: bf16[8,8,32], index: 2, kind: input, shape index: {}]
  %s3 = inlined_call_operand.vmem [shape: f32[8,1], index: 3, kind: input, shape index: {}]
  %s4 = inlined_call_operand.vmem [shape: f32[2,8,8,80], index: 4, kind: output, shape index: {}]
  %s5 = sld [smem:[#allocation0]]
  $region49: #{new_conv_down_forward.1} parent=0
    _
  %s7 = ssub.s32 1, %s5
  %s8 = scalar_select 0, %s7, %s5
  loop: start=0, step=1, limit=18
  $region2: #{new_conv_down_forward.1} parent=0 // loop_pre_header
    _
  $region3: #{new_conv_down_forward.1} parent=0 // loop_header
    %s10 = sphi 0, %s14
    %p11 = scmp.ge.s32.totalorder %s10, 18
    %s17 = sphi 0, %s29
    %s18 = sphi 0, %s25
    %s19 = sphi 0, %s17
    %s20 = sphi 0, %s18
    %s21 = sphi 0, %s19
    %s22 = sphi 0, %s20
    %s34 = sphi 0, %s36
    %s37 = sphi 0, %s34
    %s38 = sphi 0, %s37
    %s54 = sphi 0, %s38
    %s64 = sphi 0, %s66
    %s67 = sphi 0, %s64
    %s68 = sphi 0, %s67
    %s84 = sphi 0, %s68
    %s88 = sphi 0, %s88
    %s90 = sphi 0, %s88
    %s91 = sphi 0, %s90
    %s105 = sphi 0, %s91
    %s109 = sphi 0, %s109
    %s111 = sphi 0, %s109
    %s112 = sphi 0, %s111
    %s126 = sphi 0, %s112
    %s134 = sphi 0, %s136
    %s137 = sphi 0, %s134
    %s138 = sphi 0, %s137
    %s154 = sphi 0, %s138
  $region4: #{new_conv_down_forward.1} parent=0 // loop_header_branch
    %13 = sbr.rel (%p11) target = $region8
  $region5: #{new_conv_down_forward.1} parent=0 // loop_body
    %s15 = ssub.s32 %s10, 1
    %s16 = ssub.s32 %s10, 2
    %s23 = sadd.s32 1, %s18
    %p24 = scmp.ge.s32.totalorder %s23, 8
    %s25 = scalar_select %p24, 0, %s23
    %s26 = sadd.s32 1, %s17
    %s27 = scalar_select %p24, %s26, %s17
    %p28 = scmp.ge.s32.totalorder %s27, 2
    %s29 = scalar_select %p28, 0, %s27
    %s30 = ssub.s32 %s17, %s29
    %s31 = ssub.s32 %s18, %s25
    %s32 = sor.u32 %s30, %s31
    %p33 = scmp.eq.s32.totalorder %s32, 0
    %s35 = sadd.s32 %s34, 1
    %s36 = scalar_select %p33, %s34, %s35
    %p39 = pneg %p33
    %p40 = scmp.eq.s32.totalorder %s10, 15
    %p41 = por %p39, %p40
    %p42 = scmp.ne.s32.totalorder %s34, %s37
    %p43 = scmp.eq.s32.totalorder %s10, 0
    %p44 = por %p42, %p43
    %p45 = scmp.ne.s32.totalorder %s34, %s37
    %p46 = scmp.eq.s32.totalorder %s15, 15
    %p47 = por %p45, %p46
    %p48 = scmp.ne.s32.totalorder %s37, %s38
    %p49 = scmp.eq.s32.totalorder %s15, 0
    %p50 = por %p48, %p49
    %p51 = scmp.ne.s32.totalorder %s37, %s38
    %p52 = scmp.eq.s32.totalorder %s16, 15
    %p53 = por %p51, %p52
    %p55 = scmp.ne.s32.totalorder %s38, %s54
    %p56 = scmp.eq.s32.totalorder %s16, 0
    %p57 = por %p55, %p56
    %s58 = sadd.s32 %s18, 1
    %s59 = sadd.s32 %s25, 1
    %s60 = ssub.s32 %s17, %s29
    %s61 = ssub.s32 %s58, %s59
    %s62 = sor.u32 %s60, %s61
    %p63 = scmp.eq.s32.totalorder %s62, 0
    %s65 = sadd.s32 %s64, 1
    %s66 = scalar_select %p63, %s64, %s65
    %p69 = pneg %p63
    %p70 = scmp.eq.s32.totalorder %s10, 15
    %p71 = por %p69, %p70
    %p72 = scmp.ne.s32.totalorder %s64, %s67
    %p73 = scmp.eq.s32.totalorder %s10, 0
    %p74 = por %p72, %p73
    %p75 = scmp.ne.s32.totalorder %s64, %s67
    %p76 = scmp.eq.s32.totalorder %s15, 15
    %p77 = por %p75, %p76
    %p78 = scmp.ne.s32.totalorder %s67, %s68
    %p79 = scmp.eq.s32.totalorder %s15, 0
    %p80 = por %p78, %p79
    %p81 = scmp.ne.s32.totalorder %s67, %s68
    %p82 = scmp.eq.s32.totalorder %s16, 15
    %p83 = por %p81, %p82
    %p85 = scmp.ne.s32.totalorder %s68, %s84
    %p86 = scmp.eq.s32.totalorder %s16, 0
    %p87 = por %p85, %p86
    %s89 = sadd.s32 %s88, 1
    %p92 = scmp.eq.s32.totalorder %s10, 15
    %p93 = scmp.ne.s32.totalorder %s88, %s90
    %p94 = scmp.eq.s32.totalorder %s10, 0
    %p95 = por %p93, %p94
    %p96 = scmp.ne.s32.totalorder %s88, %s90
    %p97 = scmp.eq.s32.totalorder %s15, 15
    %p98 = por %p96, %p97
    %p99 = scmp.ne.s32.totalorder %s90, %s91
    %p100 = scmp.eq.s32.totalorder %s15, 0
    %p101 = por %p99, %p100
    %p102 = scmp.ne.s32.totalorder %s90, %s91
    %p103 = scmp.eq.s32.totalorder %s16, 15
    %p104 = por %p102, %p103
    %p106 = scmp.ne.s32.totalorder %s91, %s105
    %p107 = scmp.eq.s32.totalorder %s16, 0
    %p108 = por %p106, %p107
    %s110 = sadd.s32 %s109, 1
    %p113 = scmp.eq.s32.totalorder %s10, 15
    %p114 = scmp.ne.s32.totalorder %s109, %s111
    %p115 = scmp.eq.s32.totalorder %s10, 0
    %p116 = por %p114, %p115
    %p117 = scmp.ne.s32.totalorder %s109, %s111
    %p118 = scmp.eq.s32.totalorder %s15, 15
    %p119 = por %p117, %p118
    %p120 = scmp.ne.s32.totalorder %s111, %s112
    %p121 = scmp.eq.s32.totalorder %s15, 0
    %p122 = por %p120, %p121
    %p123 = scmp.ne.s32.totalorder %s111, %s112
    %p124 = scmp.eq.s32.totalorder %s16, 15
    %p125 = por %p123, %p124
    %p127 = scmp.ne.s32.totalorder %s112, %s126
    %p128 = scmp.eq.s32.totalorder %s16, 0
    %p129 = por %p127, %p128
    %s130 = ssub.s32 %s17, %s29
    %s131 = ssub.s32 %s18, %s25
    %s132 = sor.u32 %s130, %s131
    %p133 = scmp.eq.s32.totalorder %s132, 0
    %s135 = sadd.s32 %s134, 1
    %s136 = scalar_select %p133, %s134, %s135
    %p139 = pneg %p133
    %p140 = scmp.eq.s32.totalorder %s10, 15
    %p141 = por %p139, %p140
    %p142 = scmp.ne.s32.totalorder %s134, %s137
    %p143 = scmp.eq.s32.totalorder %s10, 0
    %p144 = por %p142, %p143
    %p145 = scmp.ne.s32.totalorder %s134, %s137
    %p146 = scmp.eq.s32.totalorder %s15, 15
    %p147 = por %p145, %p146
    %p148 = scmp.ne.s32.totalorder %s137, %s138
    %p149 = scmp.eq.s32.totalorder %s15, 0
    %p150 = por %p148, %p149
    %p151 = scmp.ne.s32.totalorder %s137, %s138
    %p152 = scmp.eq.s32.totalorder %s16, 15
    %p153 = por %p151, %p152
    %p155 = scmp.ne.s32.totalorder %s138, %s154
    %p156 = scmp.eq.s32.totalorder %s16, 0
    %p157 = por %p155, %p156
    %p158 = scmp.le.s32.totalorder 1, %s10
    %p159 = scmp.lt.s32.totalorder %s10, 17
    %p160 = pnand %p158, %p159
    %p161 = pneg %p160
    // Predicated region
    $region9: #{new_conv_down_forward.1} parent=5 // pred_check
      _
    $region10: #{new_conv_down_forward.1} parent=5 // pred_check_branch
      %163 = sbr.rel (%p160) target = $region12
    $region11: #{new_conv_down_forward.1} parent=5 // pred_region
      %s164 = ssub.s32 %s10, 1
      // Predicated region
      $region13: #{new_conv_down_forward.1} parent=11 // pred_check
        %p165 = pneg %p101
      $region14: #{new_conv_down_forward.1} parent=11 // pred_check_branch
        %167 = sbr.rel (%p165) target = $region16
      $region15: #{new_conv_down_forward.1} parent=11 // pred_region
        _
      $region16: #{new_conv_down_forward.1} parent=11 // pred_fallthru
        _
      // Predicated region
      $region17: #{new_conv_down_forward.1} parent=11 // pred_check
        %p168 = pneg %p122
      $region18: #{new_conv_down_forward.1} parent=11 // pred_check_branch
        %170 = sbr.rel (%p168) target = $region20
      $region19: #{new_conv_down_forward.1} parent=11 // pred_region
        _
      $region20: #{new_conv_down_forward.1} parent=11 // pred_fallthru
        _
    $region12: #{new_conv_down_forward.1} parent=5 // pred_fallthru
      _
    %p171 = scmp.lt.s32.totalorder %s10, 16
    // Predicated region
    $region21: #{new_conv_down_forward.1} parent=5 // pred_check
      %p172 = pneg %p171
    $region22: #{new_conv_down_forward.1} parent=5 // pred_check_branch
      %174 = sbr.rel (%p172) target = $region24
    $region23: #{new_conv_down_forward.1} parent=5 // pred_region
      // Predicated region
      $region25: #{new_conv_down_forward.1} parent=23 // pred_check
        %p175 = pneg %p44
      $region26: #{new_conv_down_forward.1} parent=23 // pred_check_branch
        %177 = sbr.rel (%p175) target = $region28
      $region27: #{new_conv_down_forward.1} parent=23 // pred_region
        %p178 = scmp.lt.s32.totalorder %s17, 1
        %s179 = scalar_select %p178, %s17, 1
        %p180 = scmp.lt.s32.totalorder %s18, 8
        %s181 = scalar_select %p180, %s18, 8
        %s182 = smul.addr %s181, 4
        %s183 = smul.addr %s179, 36
        %s184 = sadd.s32 %s182, %s183
        %s185 = smul.addr %s184, 4
        %s186 = scalar_lea.vmem %s0, %s185
      $region28: #{new_conv_down_forward.1} parent=23 // pred_fallthru
        _
      // Predicated region
      $region29: #{new_conv_down_forward.1} parent=23 // pred_check
        %p187 = pneg %p74
      $region30: #{new_conv_down_forward.1} parent=23 // pred_check_branch
        %189 = sbr.rel (%p187) target = $region32
      $region31: #{new_conv_down_forward.1} parent=23 // pred_region
        %s190 = sadd.s32 %s18, 1
        %p191 = scmp.lt.s32.totalorder %s17, 1
        %s192 = scalar_select %p191, %s17, 1
        %p193 = scmp.lt.s32.totalorder %s190, 8
        %s194 = scalar_select %p193, %s190, 8
        %s195 = smul.addr %s194, 4
        %s196 = smul.addr %s192, 36
        %s197 = sadd.s32 %s195, %s196
        %s198 = smul.addr %s197, 4
        %s199 = scalar_lea.vmem %s1, %s198
        %s200 = sadd.s32 %s18, 1
      $region32: #{new_conv_down_forward.1} parent=23 // pred_fallthru
        _
    $region24: #{new_conv_down_forward.1} parent=5 // pred_fallthru
      _
    %p201 = scmp.le.s32.totalorder 1, %s10
    %p202 = scmp.lt.s32.totalorder %s10, 17
    %p203 = pnand %p201, %p202
    %p204 = pneg %p203
    // Predicated region
    $region33: #{new_conv_down_forward.1} parent=5 // pred_check
      _
    $region34: #{new_conv_down_forward.1} parent=5 // pred_check_branch
      %206 = sbr.rel (%p203) target = $region36
    $region35: #{new_conv_down_forward.1} parent=5 // pred_region
      %s207 = ssub.s32 %s10, 1
      %p208 = scmp.lt.s32.totalorder %s19, 1
      %s209 = scalar_select %p208, %s19, 1
      %p210 = scmp.lt.s32.totalorder %s20, 8
      %s211 = scalar_select %p210, %s20, 8
      %s212 = smul.addr %s211, 4
      %s213 = smul.addr %s209, 36
      %s214 = sadd.s32 %s212, %s213
      %s215 = smul.addr %s214, 4
      %s216 = scalar_lea.vmem %s0, %s215
      %p217 = pneg %p50
      %p218 = pneg %p47
      %s219 = sadd.s32 %s20, 1
      %p220 = scmp.lt.s32.totalorder %s19, 1
      %s221 = scalar_select %p220, %s19, 1
      %p222 = scmp.lt.s32.totalorder %s219, 8
      %s223 = scalar_select %p222, %s219, 8
      %s224 = smul.addr %s223, 4
      %s225 = smul.addr %s221, 36
      %s226 = sadd.s32 %s224, %s225
      %s227 = smul.addr %s226, 4
      %s228 = scalar_lea.vmem %s1, %s227
      %p229 = pneg %p80
      %p230 = pneg %p77
      %p231 = pneg %p101
      %p232 = pneg %p98
      %p233 = pneg %p122
      %p234 = pneg %p119
      %p235 = pneg %p150
      %p236 = pneg %p147
      %p237 = scmp.lt.s32.totalorder %s19, 1
      %s238 = scalar_select %p237, %s19, 1
      %p239 = scmp.lt.s32.totalorder %s20, 7
      %s240 = scalar_select %p239, %s20, 7
      %s241 = smul.addr %s238, 8
      %s242 = sadd.s32 %s240, %s241
      %s243 = smul.addr %s242, 8
      %s244 = scalar_lea.vmem %s4, %s243
      %p245 = scmp.lt.s32.totalorder %s19, 1
      %s246 = scalar_select %p245, %s19, 1
      %p247 = scmp.lt.s32.totalorder %s20, 8
      %s248 = scalar_select %p247, %s20, 8
      %s249 = smul.addr %s248, 4
      %s250 = smul.addr %s246, 36
      %s251 = sadd.s32 %s249, %s250
      %s252 = smul.addr %s251, 4
      %s253 = scalar_lea.vmem %s0, %s252
      %s254 = sadd.s32 %s20, 1
      %p255 = scmp.lt.s32.totalorder %s19, 1
      %s256 = scalar_select %p255, %s19, 1
      %p257 = scmp.lt.s32.totalorder %s254, 8
      %s258 = scalar_select %p257, %s254, 8
      %s259 = smul.addr %s258, 4
      %s260 = smul.addr %s256, 36
      %s261 = sadd.s32 %s259, %s260
      %s262 = smul.addr %s261, 4
      %s263 = scalar_lea.vmem %s1, %s262
      %s264 = sadd.s32 %s20, 1
      %p265 = scmp.lt.s32.totalorder %s19, 1
      %s266 = scalar_select %p265, %s19, 1
      %p267 = scmp.lt.s32.totalorder %s20, 7
      %s268 = scalar_select %p267, %s20, 7
      %s269 = smul.addr %s266, 8
      %s270 = sadd.s32 %s268, %s269
      %s271 = smul.addr %s270, 8
      %s272 = scalar_lea.vmem %s4, %s271
      %v274 = vld [vmem:[%s253] sm:$0xf]
      %v275 = vld [vmem:[%s253 + $0x4] sm:$0xf]
      %v276 = vld [vmem:[%s253 + $0x8] sm:$0xf]
      %v277 = vld [vmem:[%s253 + $0xc] sm:$0xf]
      %v278 = vld [vmem:[%s263] sm:$0xf]
      %v279 = vld [vmem:[%s263 + $0x4] sm:$0xf]
      %v280 = vld [vmem:[%s263 + $0x8] sm:$0xf]
      %v281 = vld [vmem:[%s263 + $0xc] sm:$0xf]
      %v282 = vld [vmem:[%s2] sm:$0xf]
      %s283 = scalar_lea.vmem %s2, 4
      %v284 = vld [vmem:[%s283] sm:$0xf]
      %v289 = vunpack.c.l.b16 %v274
      %v290 = vunpack.c.l.b16 %v275
      %v291 = vunpack.c.l.b16 %v276
      %v292 = vunpack.c.l.b16 %v277
      %v293 = vpack.c.b16 %v290, %v289
      %v294 = vpack.c.b16 %v292, %v291
      %295 = vrot.lane.b32.xlu0 %v293, 127
      %v296 = vpop.permute.xlu0 %295
      %297 = vrot.lane.b32.xlu0 %v294, 127
      %v298 = vpop.permute.xlu0 %297
      %vm301 = vcmask 261120
      %v303 = vsel %vm301, %v284, 0
      %305 = vmatpush.bf16.msra.mxu0 0
      %306 = vmatpush.bf16.msra.mxu0 0
      %307 = vmatpush.bf16.msra.mxu0 0
      %308 = vmatpush.bf16.msra.mxu0 0
      %309 = vmatpush.bf16.msra.mxu0 0
      %310 = vmatpush.bf16.msra.mxu0 0
      %311 = vmatpush.bf16.msra.mxu0 %v298
      %312 = vmatpush.bf16.msra.mxu0 %v296
      %313 = vmatmul.bf16.gmra.mxu0 %v303
      %v314 = vpop.f32.mrf.mxu0
      %v315 = vadd.f32 0.0, %v314
      %v316 = vpop.f32.mrf.mxu0
      %317 = vdwg.mxu0
      %v321 = vsel %vm301, %v282, 0
      %323 = vmatpush.bf16.msra.mxu0 0
      %324 = vmatpush.bf16.msra.mxu0 0
      %325 = vmatpush.bf16.msra.mxu0 0
      %326 = vmatpush.bf16.msra.mxu0 0
      %327 = vmatpush.bf16.msra.mxu0 0
      %328 = vmatpush.bf16.msra.mxu0 0
      %329 = vmatpush.bf16.msra.mxu0 %v294
      %330 = vmatpush.bf16.msra.mxu0 %v293
      %331 = vmatmul.bf16.gmra.mxu0 %v321
      %v332 = vpop.f32.mrf.mxu0
      %v333 = vadd.f32 %v315, %v332
      %v334 = vpop.f32.mrf.mxu0
      %335 = vdwg.mxu0
      %s336 = scalar_lea.vmem %s2, 8
      %v337 = vld [vmem:[%s336] sm:$0xf]
      %338 = vrot.lane.b32.xlu0 %v293, 118
      %v339 = vpop.permute.xlu0 %338
      %340 = vrot.lane.b32.xlu0 %v294, 118
      %v341 = vpop.permute.xlu0 %340
      %v345 = vsel %vm301, %v337, 0
      %347 = vmatpush.bf16.msra.mxu0 0
      %348 = vmatpush.bf16.msra.mxu0 0
      %349 = vmatpush.bf16.msra.mxu0 0
      %350 = vmatpush.bf16.msra.mxu0 0
      %351 = vmatpush.bf16.msra.mxu0 0
      %352 = vmatpush.bf16.msra.mxu0 0
      %353 = vmatpush.bf16.msra.mxu0 %v341
      %354 = vmatpush.bf16.msra.mxu0 %v339
      %355 = vmatmul.bf16.gmra.mxu0 %v345
      %v356 = vpop.f32.mrf.mxu0
      %v357 = vadd.f32 0.0, %v356
      %v358 = vpop.f32.mrf.mxu0
      %359 = vdwg.mxu0
      %v360 = vadd.f32 %v333, %v357
      %s361 = scalar_lea.vmem %s2, 12
      %v362 = vld [vmem:[%s361] sm:$0xf]
      %363 = vrot.lane.b32.xlu0 %v293, 117
      %v364 = vpop.permute.xlu0 %363
      %365 = vrot.lane.b32.xlu0 %v294, 117
      %v366 = vpop.permute.xlu0 %365
      %v370 = vsel %vm301, %v362, 0
      %372 = vmatpush.bf16.msra.mxu0 0
      %373 = vmatpush.bf16.msra.mxu0 0
      %374 = vmatpush.bf16.msra.mxu0 0
      %375 = vmatpush.bf16.msra.mxu0 0
      %376 = vmatpush.bf16.msra.mxu0 0
      %377 = vmatpush.bf16.msra.mxu0 0
      %378 = vmatpush.bf16.msra.mxu0 %v366
      %379 = vmatpush.bf16.msra.mxu0 %v364
      %380 = vmatmul.bf16.gmra.mxu0 %v370
      %v381 = vpop.f32.mrf.mxu0
      %v382 = vadd.f32 0.0, %v381
      %v383 = vpop.f32.mrf.mxu0
      %384 = vdwg.mxu0
      %v385 = vadd.f32 %v360, %v382
      %s386 = scalar_lea.vmem %s2, 16
      %v387 = vld [vmem:[%s386] sm:$0xf]
      %v392 = vunpack.c.l.b16 %v278
      %v393 = vunpack.c.l.b16 %v279
      %v394 = vunpack.c.l.b16 %v280
      %v395 = vunpack.c.l.b16 %v281
      %v396 = vpack.c.b16 %v393, %v392
      %v397 = vpack.c.b16 %v395, %v394
      %v401 = vsel %vm301, %v387, 0
      %403 = vmatpush.bf16.msra.mxu0 0
      %404 = vmatpush.bf16.msra.mxu0 0
      %405 = vmatpush.bf16.msra.mxu0 0
      %406 = vmatpush.bf16.msra.mxu0 0
      %407 = vmatpush.bf16.msra.mxu0 0
      %408 = vmatpush.bf16.msra.mxu0 0
      %409 = vmatpush.bf16.msra.mxu0 %v397
      %410 = vmatpush.bf16.msra.mxu0 %v396
      %411 = vmatmul.bf16.gmra.mxu0 %v401
      %v412 = vpop.f32.mrf.mxu0
      %v413 = vadd.f32 0.0, %v412
      %v414 = vpop.f32.mrf.mxu0
      %415 = vdwg.mxu0
      %v416 = vadd.f32 %v385, %v413
      %s417 = scalar_lea.vmem %s2, 20
      %v418 = vld [vmem:[%s417] sm:$0xf]
      %419 = vrot.lane.b32.xlu0 %v396, 127
      %v420 = vpop.permute.xlu0 %419
      %421 = vrot.lane.b32.xlu0 %v397, 127
      %v422 = vpop.permute.xlu0 %421
      %v426 = vsel %vm301, %v418, 0
      %428 = vmatpush.bf16.msra.mxu0 0
      %429 = vmatpush.bf16.msra.mxu0 0
      %430 = vmatpush.bf16.msra.mxu0 0
      %431 = vmatpush.bf16.msra.mxu0 0
      %432 = vmatpush.bf16.msra.mxu0 0
      %433 = vmatpush.bf16.msra.mxu0 0
      %434 = vmatpush.bf16.msra.mxu0 %v422
      %435 = vmatpush.bf16.msra.mxu0 %v420
      %436 = vmatmul.bf16.gmra.mxu0 %v426
      %v437 = vpop.f32.mrf.mxu0
      %v438 = vadd.f32 0.0, %v437
      %v439 = vpop.f32.mrf.mxu0
      %440 = vdwg.mxu0
      %v441 = vadd.f32 %v416, %v438
      %s442 = scalar_lea.vmem %s2, 24
      %v443 = vld [vmem:[%s442] sm:$0xf]
      %444 = vrot.lane.b32.xlu0 %v396, 118
      %v445 = vpop.permute.xlu0 %444
      %446 = vrot.lane.b32.xlu0 %v397, 118
      %v447 = vpop.permute.xlu0 %446
      %v451 = vsel %vm301, %v443, 0
      %453 = vmatpush.bf16.msra.mxu0 0
      %454 = vmatpush.bf16.msra.mxu0 0
      %455 = vmatpush.bf16.msra.mxu0 0
      %456 = vmatpush.bf16.msra.mxu0 0
      %457 = vmatpush.bf16.msra.mxu0 0
      %458 = vmatpush.bf16.msra.mxu0 0
      %459 = vmatpush.bf16.msra.mxu0 %v447
      %460 = vmatpush.bf16.msra.mxu0 %v445
      %461 = vmatmul.bf16.gmra.mxu0 %v451
      %v462 = vpop.f32.mrf.mxu0
      %v463 = vadd.f32 0.0, %v462
      %v464 = vpop.f32.mrf.mxu0
      %465 = vdwg.mxu0
      %v466 = vadd.f32 %v441, %v463
      %s467 = scalar_lea.vmem %s2, 28
      %v468 = vld [vmem:[%s467] sm:$0xf]
      %469 = vrot.lane.b32.xlu0 %v396, 117
      %v470 = vpop.permute.xlu0 %469
      %471 = vrot.lane.b32.xlu0 %v397, 117
      %v472 = vpop.permute.xlu0 %471
      %v476 = vsel %vm301, %v468, 0
      %478 = vmatpush.bf16.msra.mxu0 0
      %479 = vmatpush.bf16.msra.mxu0 0
      %480 = vmatpush.bf16.msra.mxu0 0
      %481 = vmatpush.bf16.msra.mxu0 0
      %482 = vmatpush.bf16.msra.mxu0 0
      %483 = vmatpush.bf16.msra.mxu0 0
      %484 = vmatpush.bf16.msra.mxu0 %v472
      %485 = vmatpush.bf16.msra.mxu0 %v470
      %486 = vmatmul.bf16.gmra.mxu0 %v476
      %v487 = vpop.f32.mrf.mxu0
      %v488 = vadd.f32 0.0, %v487
      %v489 = vpop.f32.mrf.mxu0
      %490 = vdwg.mxu0
      %v491 = vadd.f32 %v466, %v488
      %v492 = vld [vmem:[%s3] sm:$0xff]
      %494 = vset.pattern.permute.xlu0 0
      %495 = vperm.xlu0 %494, %v492
      %v496 = vpop.permute.xlu0 %495
      %v498 = vadd.f32 %v491, %v496
      %vm499 = vcmask 654336
      %500 = vst.msk [vmem:[%s272] sm:$0xff] %vm499, %v498
      %p501 = scmp.lt.s32.totalorder %s19, 1
      %s502 = scalar_select %p501, %s19, 1
      %p503 = scmp.lt.s32.totalorder %s20, 7
      %s504 = scalar_select %p503, %s20, 7
      %s505 = smul.addr %s502, 8
      %s506 = sadd.s32 %s504, %s505
      %s507 = smul.addr %s506, 8
      %s508 = scalar_lea.vmem %s4, %s507
      // Predicated region
      $region37: #{new_conv_down_forward.1} parent=35 // pred_check
        %p509 = pneg %p147
      $region38: #{new_conv_down_forward.1} parent=35 // pred_check_branch
        %511 = sbr.rel (%p509) target = $region40
      $region39: #{new_conv_down_forward.1} parent=35 // pred_region
        _
      $region40: #{new_conv_down_forward.1} parent=35 // pred_fallthru
        _
    $region36: #{new_conv_down_forward.1} parent=5 // pred_fallthru
      _
    %p512 = scmp.le.s32.totalorder 2, %s10
    // Predicated region
    $region41: #{new_conv_down_forward.1} parent=5 // pred_check
      %p513 = pneg %p512
    $region42: #{new_conv_down_forward.1} parent=5 // pred_check_branch
      %515 = sbr.rel (%p513) target = $region44
    $region43: #{new_conv_down_forward.1} parent=5 // pred_region
      %s516 = ssub.s32 %s10, 2
      // Predicated region
      $region45: #{new_conv_down_forward.1} parent=43 // pred_check
        %p517 = pneg %p153
      $region46: #{new_conv_down_forward.1} parent=43 // pred_check_branch
        %519 = sbr.rel (%p517) target = $region48
      $region47: #{new_conv_down_forward.1} parent=43 // pred_region
        %p520 = scmp.lt.s32.totalorder %s21, 1
        %s521 = scalar_select %p520, %s21, 1
        %p522 = scmp.lt.s32.totalorder %s22, 7
        %s523 = scalar_select %p522, %s22, 7
        %s524 = smul.addr %s521, 8
        %s525 = sadd.s32 %s523, %s524
        %s526 = smul.addr %s525, 8
        %s527 = scalar_lea.vmem %s4, %s526
      $region48: #{new_conv_down_forward.1} parent=43 // pred_fallthru
        _
    $region44: #{new_conv_down_forward.1} parent=5 // pred_fallthru
      _
  $region6: #{new_conv_down_forward.1} parent=0 // loop_footer
    %s14 = sadd.s32 1, %s10
  $region7: #{new_conv_down_forward.1} parent=0 // loop_footer_branch
    %9 = sbr.rel target = $region3
  $region8: #{new_conv_down_forward.1} parent=0 // loop_exit
    _

</llo_original>
